<compile_context>
chip_gen: v7x
topology: tpu7x:2x2x1
jax: 0.10.0
libtpu: 0.0.40
codegen_flags: <defaults>
</compile_context>

<pallas_src>
import jax
import jax.numpy as jnp
from jax.experimental import pallas as pl
from jax.experimental.pallas import tpu as pltpu


def _linear_kernel(x_ref, w_ref, b_ref, o_ref, acc_ref):
    # x_ref: (TN, TK) int8   w_ref: (OUT, TK) bf16   b_ref: (1, OUT) f32
    # o_ref: (TN, OUT) f32   acc_ref: (TN, OUT) f32 scratch
    k = pl.program_id(1)

    @pl.when(k == 0)
    def _():
        acc_ref[...] = jnp.zeros_like(acc_ref)

    x = x_ref[...].astype(jnp.bfloat16)           # in-kernel x.float() (VPU, hidden under DMA)
    acc_ref[...] += jax.lax.dot_general(          # (TN,TK) x (OUT,TK) -> (TN,OUT), contract on K
        x, w_ref[...],
        dimension_numbers=(((1,), (1,)), ((), ())),
        preferred_element_type=jnp.float32,       # f32 accumulation on the MXU
    )

    @pl.when(k == pl.num_programs(1) - 1)
    def _():
        o_ref[...] = acc_ref[...] + b_ref[...]


def prepare_params(weight, bias):
    """Pre-pack parameters once, outside the per-call path.

    weight: (OUT, F) torch-style Linear weight -> bf16, same layout (no transpose)
    bias  : (OUT,)                             -> f32, (1, OUT)
    """
    w = weight.astype(jnp.bfloat16)
    b = bias.astype(jnp.float32).reshape(1, bias.shape[0])
    return w, b


def _pick_tk(f, max_tk):
    """Largest K tile: full F if it fits, else a multiple-of-128 divisor of F."""
    if f <= max_tk:
        return f
    tk = (max_tk // 128) * 128
    while tk >= 128:
        if f % tk == 0:
            return tk
        tk -= 128
    return f  # no clean divisor: fall back to a single (possibly large) block


def binvox_ml_model_forward(x, w_packed, b_packed, *, max_tk=16384):
    """Forward pass of BinvoxMLModel: flatten -> x.float() @ W^T + b.

    x        : (N, ...) int8/any numeric (cast to float happens in-kernel)
    w_packed : (OUT, F) bf16 (from prepare_params)
    b_packed : (1, OUT) f32
    returns  : (N, OUT) f32
    """
    n = x.shape[0]
    x_flat = x.reshape(n, -1)                 # nn.Flatten(), row-major, dtype untouched
    f = x_flat.shape[1]
    out_dim = w_packed.shape[0]

    # Batch tile: full batch if small, else a multiple of 8.  K tile keeps the
    # double-buffered x + weight tiles comfortably under the 32 MiB scoped
    # VMEM (and v7x's 64 MiB physical VMEM): 2*(512*tk*1B + 5*tk*2B) ~ 17 MiB
    # at tk=16384.
    tn = n if n <= 512 else 512
    tk = _pick_tk(f, max_tk)
    grid = (pl.cdiv(n, tn), pl.cdiv(f, tk))

    cost = pl.CostEstimate(
        flops=2 * n * f * out_dim,
        transcendentals=0,
        bytes_accessed=(x_flat.size * x_flat.dtype.itemsize
                        + w_packed.size * 2
                        + b_packed.size * 4
                        + n * out_dim * 4),
    )

    return pl.pallas_call(
        _linear_kernel,
        out_shape=jax.ShapeDtypeStruct((n, out_dim), jnp.float32),
        grid=grid,
        in_specs=[
            pl.BlockSpec((tn, tk), lambda i, k: (i, k)),        # x: tiled over batch and K
            pl.BlockSpec((out_dim, tk), lambda i, k: (0, k)),   # weight: K-tiled, reused across batch
            pl.BlockSpec((1, out_dim), lambda i, k: (0, 0)),    # bias: VMEM-resident
        ],
        out_specs=pl.BlockSpec((tn, out_dim), lambda i, k: (i, 0)),
        scratch_shapes=[pltpu.VMEM((tn, out_dim), jnp.float32)],
        compiler_params=pltpu.CompilerParams(
            dimension_semantics=("parallel", "arbitrary"),      # v7x shards batch across 2 TCs
            vmem_limit_bytes=32 * 1024 * 1024,
        ),
        cost_estimate=cost,
    )(x_flat, w_packed, b_packed)


if __name__ == "__main__":
    # Small shapes consistent with the module: N=2, C=4, H=W=16 -> F=1024, OUT=5.
    key = jax.random.PRNGKey(0)
    kx, kw, kb = jax.random.split(key, 3)

    N, C, H, W = 2, 4, 16, 16
    F = C * H * W
    OUT = 5

    # Occupancy-grid-like 0/1 input stored as int8 (exercises the in-kernel cast).
    x = (jax.random.uniform(kx, (N, C, H, W)) > 0.5).astype(jnp.int8)

    # Deterministic parameter init (torch nn.Linear-style uniform bounds).
    bound = 1.0 / jnp.sqrt(jnp.float32(F))
    weight = jax.random.uniform(kw, (OUT, F), jnp.float32, -bound, bound)
    bias = jax.random.uniform(kb, (OUT,), jnp.float32, -bound, bound)

    # Pre-pack params once (bf16 weight, (OUT, F) layout; f32 bias).
    w_packed, b_packed = prepare_params(weight, bias)

    # Reference in plain JAX against the same bf16-quantized weight (kernel
    # accumulates in f32; x is 0/1 so products are exact in bf16).
    ref = (x.astype(jnp.float32).reshape(N, -1)
           @ w_packed.astype(jnp.float32).T
           + b_packed.astype(jnp.float32))

    # 1) Default path: F fits in one K tile (weight fully VMEM-resident).
    out = jax.block_until_ready(binvox_ml_model_forward(x, w_packed, b_packed))
    assert out.shape == (N, OUT)
    assert jnp.allclose(out, ref, atol=1e-4, rtol=1e-4)

    # 2) Force the K-tiled accumulation path (as used at real binvox sizes).
    out_kt = jax.block_until_ready(
        binvox_ml_model_forward(x, w_packed, b_packed, max_tk=256))
    assert jnp.allclose(out_kt, ref, atol=1e-4, rtol=1e-4)

    print("KERNEL_OK")
</pallas_src>

<mosaic_0001>
module attributes {stable_mosaic.version = 11 : i64} {
  func.func @_linear_kernel(%arg0: i32, %arg1: i32, %arg2: memref<2x1024xi8, #tpu.memory_space<vmem>>, %arg3: memref<5x1024xbf16, #tpu.memory_space<vmem>>, %arg4: memref<1x5xf32, #tpu.memory_space<vmem>>, %arg5: memref<2x5xf32, #tpu.memory_space<vmem>>, %arg6: memref<2x5xf32, #tpu.memory_space<vmem>>) attributes {dimension_semantics = [#tpu.dimension_semantics<parallel>, #tpu.dimension_semantics<arbitrary>], iteration_bounds = array<i64: 1, 1>, scalar_prefetch = 0 : i64, scratch_operands = 1 : i64, tpu.core_type = #tpu.core_type<tc>, window_params = [{transform_indices = @transform_0, window_bounds = array<i64: 2, 1024>}, {transform_indices = @transform_1, window_bounds = array<i64: 5, 1024>}, {pipeline_mode = #tpu.pipeline_mode<synchronous>, transform_indices = @transform_2, window_bounds = array<i64: 1, 5>}, {transform_indices = @transform_3, window_bounds = array<i64: 2, 5>}]} {
    %c0_i32 = arith.constant 0 : i32
    %0 = arith.cmpi eq, %arg1, %c0_i32 : i32
    %1 = arith.extui %0 : i1 to i32
    %c0_i32_0 = arith.constant 0 : i32
    %2 = arith.cmpi ne, %1, %c0_i32_0 : i32
    scf.if %2 {
      %cst_10 = arith.constant 0.000000e+00 : f32
      %13 = vector.broadcast %cst_10 : f32 to vector<2x5xf32>
      %c0_11 = arith.constant 0 : index
      %c0_12 = arith.constant 0 : index
      %14 = vector.load %arg6[%c0_11, %c0_12] : memref<2x5xf32, #tpu.memory_space<vmem>>, vector<2x5xf32>
      tpu.vector_store %arg6[%c0_11, %c0_12], %13 {strides = array<i32>} : memref<2x5xf32, #tpu.memory_space<vmem>>, vector<2x5xf32>,
    } else {
    }
    %c0 = arith.constant 0 : index
    %c0_1 = arith.constant 0 : index
    %3 = vector.load %arg2[%c0, %c0_1] : memref<2x1024xi8, #tpu.memory_space<vmem>>, vector<2x1024xi8>
    %4 = arith.sitofp %3 : vector<2x1024xi8> to vector<2x1024xbf16>
    %c0_2 = arith.constant 0 : index
    %c0_3 = arith.constant 0 : index
    %5 = vector.load %arg6[%c0_2, %c0_3] : memref<2x5xf32, #tpu.memory_space<vmem>>, vector<2x5xf32>
    %c0_4 = arith.constant 0 : index
    %c0_5 = arith.constant 0 : index
    %6 = vector.load %arg3[%c0_4, %c0_5] : memref<5x1024xbf16, #tpu.memory_space<vmem>>, vector<5x1024xbf16>
    %cst = arith.constant dense<0.000000e+00> : vector<2x5xf32>
    %7 = tpu.matmul %4, %6, %cst {dimension_numbers = #tpu.dot_dimension_numbers<[1], [1], [0], [0], [0, 0, 1, 0], [], []>} : vector<2x1024xbf16>, vector<5x1024xbf16>, vector<2x5xf32> -> vector<2x5xf32>
    %8 = arith.addf %5, %7 : vector<2x5xf32>
    %c0_6 = arith.constant 0 : index
    %c0_7 = arith.constant 0 : index
    %9 = vector.load %arg6[%c0_6, %c0_7] : memref<2x5xf32, #tpu.memory_space<vmem>>, vector<2x5xf32>
    tpu.vector_store %arg6[%c0_6, %c0_7], %8 {strides = array<i32>} : memref<2x5xf32, #tpu.memory_space<vmem>>, vector<2x5xf32>,
    %c0_i32_8 = arith.constant 0 : i32
    %10 = arith.cmpi eq, %arg1, %c0_i32_8 : i32
    %11 = arith.extui %10 : i1 to i32
    %c0_i32_9 = arith.constant 0 : i32
    %12 = arith.cmpi ne, %11, %c0_i32_9 : i32
    scf.if %12 {
      %c0_10 = arith.constant 0 : index
      %c0_11 = arith.constant 0 : index
      %13 = vector.load %arg6[%c0_10, %c0_11] : memref<2x5xf32, #tpu.memory_space<vmem>>, vector<2x5xf32>
      %c0_12 = arith.constant 0 : index
      %c0_13 = arith.constant 0 : index
      %14 = vector.load %arg4[%c0_12, %c0_13] : memref<1x5xf32, #tpu.memory_space<vmem>>, vector<1x5xf32>
      %15 = vector.broadcast %14 : vector<1x5xf32> to vector<2x5xf32>
      %16 = arith.addf %13, %15 : vector<2x5xf32>
      %c0_14 = arith.constant 0 : index
      %c0_15 = arith.constant 0 : index
      %17 = vector.load %arg5[%c0_14, %c0_15] : memref<2x5xf32, #tpu.memory_space<vmem>>, vector<2x5xf32>
      tpu.vector_store %arg5[%c0_14, %c0_15], %16 {strides = array<i32>} : memref<2x5xf32, #tpu.memory_space<vmem>>, vector<2x5xf32>,
    } else {
    }
    return
  }
  func.func @transform_0(%arg0: i32, %arg1: i32) -> (i32, i32) {
    %c0_i32 = arith.constant 0 : i32
    return %arg0, %arg1 : i32, i32
  }
  func.func @transform_1(%arg0: i32, %arg1: i32) -> (i32, i32) {
    %c0_i32 = arith.constant 0 : i32
    %c0_i32_0 = arith.constant 0 : i32
    return %c0_i32, %arg1 : i32, i32
  }
  func.func @transform_2(%arg0: i32, %arg1: i32) -> (i32, i32) {
    %c0_i32 = arith.constant 0 : i32
    %c0_i32_0 = arith.constant 0 : i32
    %c0_i32_1 = arith.constant 0 : i32
    return %c0_i32, %c0_i32_0 : i32, i32
  }
  func.func @transform_3(%arg0: i32, %arg1: i32) -> (i32, i32) {
    %c0_i32 = arith.constant 0 : i32
    %c0_i32_0 = arith.constant 0 : i32
    return %arg0, %c0_i32 : i32, i32
  }
}

</mosaic_0001>

<llo_original>
// kernel: tpu_custom_call.1
$region0: #{tpu_custom_call.1}
  #allocation0 [shape = 'u32[]', space=smem, size = 0x4, offset = 0x4, fixed_abs, tag = 'smem constant byte address 0x4 - core index']
  #allocation1 [shape = 'u32[144,128]{1,0:T(1,128)}', space=vmem, size = 0x12000, scoped, tag = 'internal scratch']
  #allocation2 [shape = 'f32[2,5]{1,0:T(2,128)}', space=vmem, size = 0x400, scoped, tag = 'scratch operand']
  %s0 = inlined_call_operand.hbm [shape: s8[2,1024], index: 0, kind: input, shape index: {}]
  %s1 = inlined_call_operand.hbm [shape: bf16[5,1024], index: 1, kind: input, shape index: {}]
  %s2 = inlined_call_operand.vmem [shape: f32[1,5], index: 2, kind: input, shape index: {}]
  %s3 = inlined_call_operand.hbm [shape: f32[2,5], index: 3, kind: output, shape index: {}]
  %s4 = sld [smem:[#allocation0]]
  $region38: #{tpu_custom_call.1} parent=0
    _
  %s6 = ssub.s32 1, %s4
  %s7 = scalar_select 0, %s6, %s4
  $region1: #{tpu_custom_call.1} parent=0
    #allocation3 [shape = 'u8[4096]{0}', space=vmem, size = 0x1000, scoped, tag = 'input window, operand 0, single buffered']
    #allocation4 [shape = 's32[1]{0}', space=sflag, size = 0x4, scoped, tag = 'scoped memory for tpu_custom_call.1']
    #allocation5 [shape = 's32[1]{0}', space=sflag, size = 0x4, scoped, tag = 'scoped memory for tpu_custom_call.1']
    #allocation6 [shape = 'u8[16384]{0}', space=vmem, size = 0x4000, scoped, tag = 'input window, operand 1, single buffered']
    #allocation7 [shape = 's32[1]{0}', space=sflag, size = 0x4, scoped, tag = 'scoped memory for tpu_custom_call.1']
    #allocation8 [shape = 'u8[1024]{0}', space=vmem, size = 0x400, scoped, tag = 'output window, operand 0, single buffered']
    %8 = vsyncpa [#allocation4], 0
    %9 = vsyncpa [#allocation7], 0
    %10 = vsyncpa [#allocation5], 0
    // Predicated region
    $region2: #{tpu_custom_call.1} parent=1 // pred_check
      _
    $region3: #{tpu_custom_call.1} parent=1 // pred_check_branch
      %12 = sbr.rel (0) target = $region5
    $region4: #{tpu_custom_call.1} parent=1 // pred_region
      %s14 = ssub.s32 128, 128
      %15 = vsyncadd [#allocation4], %s14
      %s17 = sshll.u32 [#allocation3], 4
      %s18 = int_to_ptr.vmem [resolvable:$true] %s17
      %20 = dma.hbm_to_vmem [thread:$0]  %s0, 128, %s18, [#allocation4]
    $region5: #{tpu_custom_call.1} parent=1 // pred_fallthru
      _
    // Predicated region
    $region6: #{tpu_custom_call.1} parent=1 // pred_check
      _
    $region7: #{tpu_custom_call.1} parent=1 // pred_check_branch
      %22 = sbr.rel (0) target = $region9
    $region8: #{tpu_custom_call.1} parent=1 // pred_region
      %s24 = ssub.s32 512, 512
      %25 = vsyncadd [#allocation7], %s24
      %s27 = sshll.u32 [#allocation6], 4
      %s28 = int_to_ptr.vmem [resolvable:$true] %s27
      %30 = dma.hbm_to_vmem [thread:$0]  %s1, 512, %s28, [#allocation7]
    $region9: #{tpu_custom_call.1} parent=1 // pred_fallthru
      _
    // Predicated region
    $region10: #{tpu_custom_call.1} parent=1 // pred_check
      _
    $region11: #{tpu_custom_call.1} parent=1 // pred_check_branch
      %32 = sbr.rel (0) target = $region13
    $region12: #{tpu_custom_call.1} parent=1 // pred_region
      _
    $region13: #{tpu_custom_call.1} parent=1 // pred_fallthru
      _
    // Predicated region
    $region14: #{tpu_custom_call.1} parent=1 // pred_check
      _
    $region15: #{tpu_custom_call.1} parent=1 // pred_check_branch
      %34 = sbr.rel (0) target = $region17
    $region16: #{tpu_custom_call.1} parent=1 // pred_region
      %35 = dma.done [#allocation4], 128
    $region17: #{tpu_custom_call.1} parent=1 // pred_fallthru
      _
    // Predicated region
    $region18: #{tpu_custom_call.1} parent=1 // pred_check
      _
    $region19: #{tpu_custom_call.1} parent=1 // pred_check_branch
      %37 = sbr.rel (0) target = $region21
    $region20: #{tpu_custom_call.1} parent=1 // pred_region
      %38 = dma.done [#allocation7], 512
    $region21: #{tpu_custom_call.1} parent=1 // pred_fallthru
      _
    %p40 = scmp.eq.s32.totalorder 0, 0
    // Predicated region
    $region22: #{tpu_custom_call.1} parent=1 // pred_check
      %p41 = pneg %p40
    $region23: #{tpu_custom_call.1} parent=1 // pred_check_branch
      %43 = sbr.rel (%p41) target = $region25
    $region24: #{tpu_custom_call.1} parent=1 // pred_region
      %vm44 = vcmask 33792
      %45 = vst.msk [vmem:[#allocation2] sm:$0x3] %vm44, 0.0
    $region25: #{tpu_custom_call.1} parent=1 // pred_fallthru
      _
    %v46 = vld [vmem:[#allocation3] sm:$0xff]
    %v47 = vcombine.high %v46, %v46
    %v49 = vunpack.c.l.s4 1935823168
    %v50 = vunpack.c.0.s8 %v49
    %v51 = vlaneseq
    %v52 = vshrl.u32 %v51, 7
    %v53 = vsub.s32 %v50, %v52
    %v54 = vrot.slane %v46, %v53
    %v56 = vunpack.c.l.s4 1935823168
    %v57 = vunpack.c.0.s8 %v56
    %v58 = vlaneseq
    %v59 = vshrl.u32 %v58, 7
    %v60 = vsub.s32 %v57, %v59
    %v61 = vrot.slane %v47, %v60
    %v62 = vunpack.c.l.s8.bf16 %v54
    %v63 = vunpack.c.h.s8.bf16 %v54
    %v64 = vunpack.c.l.s8.bf16 %v61
    %v65 = vunpack.c.h.s8.bf16 %v61
    %v66 = vld [vmem:[#allocation2] sm:$0x3]
    %v67 = vld [vmem:[#allocation6] sm:$0x77]
    %v68 = vld [vmem:[#allocation6 + $0x8] sm:$0x77]
    %v69 = vld [vmem:[#allocation6 + $0x10] sm:$0x77]
    %v70 = vld [vmem:[#allocation6 + $0x18] sm:$0x77]
    %v75 = vunpack.c.l.b16 %v62
    %v76 = vunpack.c.h.b16 %v62
    %v77 = vunpack.c.l.b16 %v63
    %v78 = vunpack.c.h.b16 %v63
    %v79 = vunpack.c.l.b16 %v64
    %v80 = vunpack.c.h.b16 %v64
    %v81 = vunpack.c.l.b16 %v65
    %v82 = vunpack.c.h.b16 %v65
    %v83 = vpack.c.b16 %v75, %v75
    %v84 = vpack.c.b16 %v76, %v76
    %v85 = vpack.c.b16 %v77, %v77
    %v86 = vpack.c.b16 %v78, %v78
    %v87 = vpack.c.b16 %v79, %v79
    %v88 = vpack.c.b16 %v80, %v80
    %v89 = vpack.c.b16 %v81, %v81
    %v90 = vpack.c.b16 %v82, %v82
    %v103 = vunpack.c.l.b16 %v67
    %v104 = vunpack.c.h.b16 %v67
    %v105 = vunpack.c.l.b16 %v68
    %v106 = vunpack.c.h.b16 %v68
    %v107 = vunpack.c.l.b16 %v69
    %v108 = vunpack.c.h.b16 %v69
    %v109 = vunpack.c.l.b16 %v70
    %v110 = vunpack.c.h.b16 %v70
    %v111 = vpack.c.b16 %v103, %v103
    %v112 = vpack.c.b16 %v104, %v104
    %v113 = vpack.c.b16 %v105, %v105
    %v114 = vpack.c.b16 %v106, %v106
    %v115 = vpack.c.b16 %v107, %v107
    %v116 = vpack.c.b16 %v108, %v108
    %v117 = vpack.c.b16 %v109, %v109
    %v118 = vpack.c.b16 %v110, %v110
    %127 = vmatprep.subr.bf16.mxu0 %v112
    %128 = vmatpush1.bf16.xpose.msra.mxu0 %v111
    %129 = vmatprep.subr.bf16.mxu0 0
    %130 = vmatpush1.bf16.xpose.msra.mxu0 0
    %131 = vmatprep.subr.bf16.mxu0 0
    %132 = vmatpush1.bf16.xpose.msra.mxu0 0
    %133 = vmatprep.subr.bf16.mxu0 0
    %134 = vmatpush1.bf16.xpose.msra.mxu0 0
    %135 = vmatprep.subr.bf16.mxu0 0
    %136 = vmatpush1.bf16.xpose.msra.mxu0 0
    %137 = vmatprep.subr.bf16.mxu0 0
    %138 = vmatpush1.bf16.xpose.msra.mxu0 0
    %139 = vmatprep.subr.bf16.mxu0 0
    %140 = vmatpush1.bf16.xpose.msra.mxu0 0
    %141 = vmatprep.subr.bf16.mxu0 0
    %142 = vmatpush1.bf16.xpose.msra.mxu0 0
    %143 = vmatprep.subr.bf16.mxu0 0
    %144 = vmatpush1.bf16.xpose.msra.mxu0 0
    %145 = vmatprep.subr.bf16.mxu0 0
    %146 = vmatpush1.bf16.xpose.msra.mxu0 0
    %147 = vmatprep.subr.bf16.mxu0 0
    %148 = vmatpush1.bf16.xpose.msra.mxu0 0
    %149 = vmatprep.subr.bf16.mxu0 0
    %150 = vmatpush1.bf16.xpose.msra.mxu0 0
    %151 = vmatprep.subr.bf16.mxu0 0
    %152 = vmatpush1.bf16.xpose.msra.mxu0 0
    %153 = vmatprep.subr.bf16.mxu0 0
    %154 = vmatpush1.bf16.xpose.msra.mxu0 0
    %155 = vmatprep.subr.bf16.mxu0 0
    %156 = vmatpush1.bf16.xpose.msra.mxu0 0
    %157 = vmatprep.subr.bf16.mxu0 0
    %158 = vmatpush1.bf16.xpose.msra.mxu0 0
    %159 = vmatprep.mubr.bf16.mxu0 %v84
    %160 = vmatmul.mubr.bf16.gmra.mrb[0].mxu0 %v83
    %v161 = vpop.f32.mrb[0].mxu0
    %v162 = vadd.f32 0.0, %v161
    %v163 = vpop.f32.mrb[0].mxu0
    %v164 = vpop.f32.mrb[0].mxu0
    %v165 = vpop.f32.mrb[0].mxu0
    %166 = vdwg.mxu0
    %167 = vmatprep.subr.bf16.mxu0 %v114
    %168 = vmatpush1.bf16.xpose.msra.mxu0 %v113
    %169 = vmatprep.subr.bf16.mxu0 0
    %170 = vmatpush1.bf16.xpose.msra.mxu0 0
    %171 = vmatprep.subr.bf16.mxu0 0
    %172 = vmatpush1.bf16.xpose.msra.mxu0 0
    %173 = vmatprep.subr.bf16.mxu0 0
    %174 = vmatpush1.bf16.xpose.msra.mxu0 0
    %175 = vmatprep.subr.bf16.mxu0 0
    %176 = vmatpush1.bf16.xpose.msra.mxu0 0
    %177 = vmatprep.subr.bf16.mxu0 0
    %178 = vmatpush1.bf16.xpose.msra.mxu0 0
    %179 = vmatprep.subr.bf16.mxu0 0
    %180 = vmatpush1.bf16.xpose.msra.mxu0 0
    %181 = vmatprep.subr.bf16.mxu0 0
    %182 = vmatpush1.bf16.xpose.msra.mxu0 0
    %183 = vmatprep.subr.bf16.mxu0 0
    %184 = vmatpush1.bf16.xpose.msra.mxu0 0
    %185 = vmatprep.subr.bf16.mxu0 0
    %186 = vmatpush1.bf16.xpose.msra.mxu0 0
    %187 = vmatprep.subr.bf16.mxu0 0
    %188 = vmatpush1.bf16.xpose.msra.mxu0 0
    %189 = vmatprep.subr.bf16.mxu0 0
    %190 = vmatpush1.bf16.xpose.msra.mxu0 0
    %191 = vmatprep.subr.bf16.mxu0 0
    %192 = vmatpush1.bf16.xpose.msra.mxu0 0
    %193 = vmatprep.subr.bf16.mxu0 0
    %194 = vmatpush1.bf16.xpose.msra.mxu0 0
    %195 = vmatprep.subr.bf16.mxu0 0
    %196 = vmatpush1.bf16.xpose.msra.mxu0 0
    %197 = vmatprep.subr.bf16.mxu0 0
    %198 = vmatpush1.bf16.xpose.msra.mxu0 0
    %199 = vmatprep.mubr.bf16.mxu0 %v86
    %200 = vmatmul.mubr.bf16.gmra.mrb[0].mxu0 %v85
    %v201 = vpop.f32.mrb[0].mxu0
    %v202 = vadd.f32 %v162, %v201
    %v203 = vpop.f32.mrb[0].mxu0
    %v204 = vpop.f32.mrb[0].mxu0
    %v205 = vpop.f32.mrb[0].mxu0
    %206 = vdwg.mxu0
    %207 = vmatprep.subr.bf16.mxu0 %v116
    %208 = vmatpush1.bf16.xpose.msra.mxu0 %v115
    %209 = vmatprep.subr.bf16.mxu0 0
    %210 = vmatpush1.bf16.xpose.msra.mxu0 0
    %211 = vmatprep.subr.bf16.mxu0 0
    %212 = vmatpush1.bf16.xpose.msra.mxu0 0
    %213 = vmatprep.subr.bf16.mxu0 0
    %214 = vmatpush1.bf16.xpose.msra.mxu0 0
    %215 = vmatprep.subr.bf16.mxu0 0
    %216 = vmatpush1.bf16.xpose.msra.mxu0 0
    %217 = vmatprep.subr.bf16.mxu0 0
    %218 = vmatpush1.bf16.xpose.msra.mxu0 0
    %219 = vmatprep.subr.bf16.mxu0 0
    %220 = vmatpush1.bf16.xpose.msra.mxu0 0
    %221 = vmatprep.subr.bf16.mxu0 0
    %222 = vmatpush1.bf16.xpose.msra.mxu0 0
    %223 = vmatprep.subr.bf16.mxu0 0
    %224 = vmatpush1.bf16.xpose.msra.mxu0 0
    %225 = vmatprep.subr.bf16.mxu0 0
    %226 = vmatpush1.bf16.xpose.msra.mxu0 0
    %227 = vmatprep.subr.bf16.mxu0 0
    %228 = vmatpush1.bf16.xpose.msra.mxu0 0
    %229 = vmatprep.subr.bf16.mxu0 0
    %230 = vmatpush1.bf16.xpose.msra.mxu0 0
    %231 = vmatprep.subr.bf16.mxu0 0
    %232 = vmatpush1.bf16.xpose.msra.mxu0 0
    %233 = vmatprep.subr.bf16.mxu0 0
    %234 = vmatpush1.bf16.xpose.msra.mxu0 0
    %235 = vmatprep.subr.bf16.mxu0 0
    %236 = vmatpush1.bf16.xpose.msra.mxu0 0
    %237 = vmatprep.subr.bf16.mxu0 0
    %238 = vmatpush1.bf16.xpose.msra.mxu0 0
    %239 = vmatprep.mubr.bf16.mxu0 %v88
    %240 = vmatmul.mubr.bf16.gmra.mrb[0].mxu0 %v87
    %v241 = vpop.f32.mrb[0].mxu0
    %v242 = vadd.f32 %v202, %v241
    %v243 = vpop.f32.mrb[0].mxu0
    %v244 = vpop.f32.mrb[0].mxu0
    %v245 = vpop.f32.mrb[0].mxu0
    %246 = vdwg.mxu0
    %247 = vmatprep.subr.bf16.mxu0 %v118
    %248 = vmatpush1.bf16.xpose.msra.mxu0 %v117
    %249 = vmatprep.subr.bf16.mxu0 0
    %250 = vmatpush1.bf16.xpose.msra.mxu0 0
    %251 = vmatprep.subr.bf16.mxu0 0
    %252 = vmatpush1.bf16.xpose.msra.mxu0 0
    %253 = vmatprep.subr.bf16.mxu0 0
    %254 = vmatpush1.bf16.xpose.msra.mxu0 0
    %255 = vmatprep.subr.bf16.mxu0 0
    %256 = vmatpush1.bf16.xpose.msra.mxu0 0
    %257 = vmatprep.subr.bf16.mxu0 0
    %258 = vmatpush1.bf16.xpose.msra.mxu0 0
    %259 = vmatprep.subr.bf16.mxu0 0
    %260 = vmatpush1.bf16.xpose.msra.mxu0 0
    %261 = vmatprep.subr.bf16.mxu0 0
    %262 = vmatpush1.bf16.xpose.msra.mxu0 0
    %263 = vmatprep.subr.bf16.mxu0 0
    %264 = vmatpush1.bf16.xpose.msra.mxu0 0
    %265 = vmatprep.subr.bf16.mxu0 0
    %266 = vmatpush1.bf16.xpose.msra.mxu0 0
    %267 = vmatprep.subr.bf16.mxu0 0
    %268 = vmatpush1.bf16.xpose.msra.mxu0 0
    %269 = vmatprep.subr.bf16.mxu0 0
    %270 = vmatpush1.bf16.xpose.msra.mxu0 0
    %271 = vmatprep.subr.bf16.mxu0 0
    %272 = vmatpush1.bf16.xpose.msra.mxu0 0
    %273 = vmatprep.subr.bf16.mxu0 0
    %274 = vmatpush1.bf16.xpose.msra.mxu0 0
    %275 = vmatprep.subr.bf16.mxu0 0
    %276 = vmatpush1.bf16.xpose.msra.mxu0 0
    %277 = vmatprep.subr.bf16.mxu0 0
    %278 = vmatpush1.bf16.xpose.msra.mxu0 0
    %279 = vmatprep.mubr.bf16.mxu0 %v90
    %280 = vmatmul.mubr.bf16.gmra.mrb[0].mxu0 %v89
    %v281 = vpop.f32.mrb[0].mxu0
    %v282 = vadd.f32 %v242, %v281
    %v283 = vpop.f32.mrb[0].mxu0
    %v284 = vpop.f32.mrb[0].mxu0
    %v285 = vpop.f32.mrb[0].mxu0
    %286 = vdwg.mxu0
    %v287 = vadd.f32 %v66, %v282
    %vm288 = vcmask 33792
    %289 = vst.msk [vmem:[#allocation2] sm:$0x3] %vm288, %v287
    // Predicated region
    $region26: #{tpu_custom_call.1} parent=1 // pred_check
      %p290 = pneg %p40
    $region27: #{tpu_custom_call.1} parent=1 // pred_check_branch
      %292 = sbr.rel (%p290) target = $region29
    $region28: #{tpu_custom_call.1} parent=1 // pred_region
      %v293 = vld [vmem:[#allocation2] sm:$0x3]
      %v294 = vld [vmem:[%s2] sm:$0x1]
      %v296 = vlaneseq
      %v297 = vshrl.u32 %v296, 7
      %v298 = vsub.s32 0, %v297
      %v299 = vrot.slane %v294, %v298
      %v301 = vadd.f32 %v293, %v299
      %302 = vst.msk [vmem:[#allocation8] sm:$0x3] %vm288, %v301
    $region29: #{tpu_custom_call.1} parent=1 // pred_fallthru
      _
    // Predicated region
    $region30: #{tpu_custom_call.1} parent=1 // pred_check
      _
    $region31: #{tpu_custom_call.1} parent=1 // pred_check_branch
      %304 = sbr.rel (0) target = $region33
    $region32: #{tpu_custom_call.1} parent=1 // pred_region
      %s306 = ssub.s32 32, 32
      %307 = vsyncadd [#allocation5], %s306
      %s309 = sshll.u32 [#allocation8], 4
      %s310 = int_to_ptr.vmem [resolvable:$true] %s309
      %312 = dma.vmem_to_hbm [thread:$0]  %s310, 32, %s3, [#allocation5]
    $region33: #{tpu_custom_call.1} parent=1 // pred_fallthru
      _
    // Predicated region
    $region34: #{tpu_custom_call.1} parent=1 // pred_check
      _
    $region35: #{tpu_custom_call.1} parent=1 // pred_check_branch
      %314 = sbr.rel (0) target = $region37
    $region36: #{tpu_custom_call.1} parent=1 // pred_region
      %315 = dma.done [#allocation5], 32
    $region37: #{tpu_custom_call.1} parent=1 // pred_fallthru
      _
    %316 = vsyncpa [#allocation4], 1
    %317 = vsyncpa [#allocation7], 1
    %318 = vsyncpa [#allocation5], 1

</llo_original>
